<compile_context>
chip_gen: v7x
topology: tpu7x:2x2x1
jax: 0.10.0
libtpu: 0.0.40
codegen_flags: <defaults>
</compile_context>

<pallas_src>
import functools

import jax
import jax.numpy as jnp
from jax.experimental import pallas as pl
from jax.experimental.pallas import tpu as pltpu


def _focal_pixels(x, t, *, gamma, ignore_index):
    """Per-pixel focal term (1-pt)^gamma * log pt and validity mask.

    x: (C, ...) float32 logits with classes on the leading axis.
    t: integer targets broadcastable against x[0:1].
    """
    C = x.shape[0]
    # Numerically-stable log-sum-exp over the class (leading) axis.
    m = jnp.max(x, axis=0, keepdims=True)                       # (1, ...)
    z = x - m                                                   # (C, ...)
    lse = jnp.log(jnp.sum(jnp.exp(z), axis=0, keepdims=True))   # (1, ...)

    # Gather the target-class shifted logit with a compare+select chain
    # (no one-hot cast/multiply, no full-size iota).
    picked_z = jnp.zeros_like(lse)
    for c in range(C):
        picked_z = jnp.where(t == c, z[c:c + 1], picked_z)

    logp_t = picked_z - lse                                     # log p_target
    one_minus = 1.0 - jnp.exp(logp_t)

    gf = float(gamma)
    if gf.is_integer() and gf >= 0:
        gi = int(gf)
        if gi == 0:
            w = jnp.ones_like(one_minus)
        else:
            w = one_minus
            for _ in range(gi - 1):                             # gamma-1 muls
                w = w * one_minus
    else:
        # Clamp: fp rounding can make logp_t marginally > 0, so one_minus can
        # be slightly negative and a fractional power would return NaN.
        w = jnp.maximum(one_minus, 0.0) ** gamma

    focal = w * logp_t
    valid = t != ignore_index
    return focal, valid


def _focal_dense_kernel(x_ref, t_ref, sum_ref, cnt_ref, *,
                        gamma, ignore_index, rows_total, tile_rows, mask_tail):
    x = x_ref[0].astype(jnp.float32)            # (C, R, 128) dense tiles
    t = t_ref[0]                                # (R, 128) int32
    focal, valid = _focal_pixels(x, t, gamma=gamma, ignore_index=ignore_index)
    if mask_tail:
        row = (jax.lax.broadcasted_iota(jnp.int32, t.shape, 0)
               + pl.program_id(1) * tile_rows)
        valid = jnp.logical_and(valid, row < rows_total)
    loss = jnp.where(valid, -focal, 0.0)
    sum_ref[...] = jnp.zeros(sum_ref.shape, jnp.float32) + jnp.sum(loss)
    cnt_ref[...] = (jnp.zeros(cnt_ref.shape, jnp.float32)
                    + jnp.sum(valid.astype(jnp.float32)))


def _focal_lane_kernel(x_ref, t_ref, sum_ref, cnt_ref, *,
                       gamma, ignore_index, hw, tile_px, mask_tail):
    x = x_ref[0].astype(jnp.float32)            # (C, T)
    t = t_ref[0]                                # (1, T) int32
    focal, valid = _focal_pixels(x, t, gamma=gamma, ignore_index=ignore_index)
    if mask_tail:
        px = (jax.lax.broadcasted_iota(jnp.int32, t.shape, 1)
              + pl.program_id(1) * tile_px)
        valid = jnp.logical_and(valid, px < hw)
    loss = jnp.where(valid, -focal, 0.0)
    sum_ref[...] = jnp.zeros(sum_ref.shape, jnp.float32) + jnp.sum(loss)
    cnt_ref[...] = (jnp.zeros(cnt_ref.shape, jnp.float32)
                    + jnp.sum(valid.astype(jnp.float32)))


def focal_loss(x_nchw, target_nhw, *, gamma=2, ignore_index=-100,
               x_block_bytes=4 * 1024 * 1024):
    """Pallas TPU focal loss. x_nchw: (N, C, H, W) float; target_nhw: (N, H, W) int."""
    N, C, H, W = x_nchw.shape
    hw = H * W
    itemsize = jnp.dtype(x_nchw.dtype).itemsize
    t_i32 = target_nhw.astype(jnp.int32)

    compiler_params = pltpu.CompilerParams(
        dimension_semantics=("parallel", "parallel"),
        vmem_limit_bytes=48 * 1024 * 1024,
    )
    out_block = (
        pl.BlockSpec((1, 1, 1, 1), lambda n, p: (n, p, 0, 0)),
        pl.BlockSpec((1, 1, 1, 1), lambda n, p: (n, p, 0, 0)),
    )

    if hw % 128 == 0:
        # Dense path: pixels on full (sublane x lane) tiles.  Free reshapes of
        # contiguous NCHW / NHW -- no HBM copies, native input dtype.
        rows = hw // 128
        x4 = x_nchw.reshape(N, C, rows, 128)
        t3 = t_i32.reshape(N, rows, 128)

        # ~x_block_bytes per x buffer (double-buffered by Pallas); multiple of
        # 8 rows for clean (8,128) tiling.  With the ~4-5x f32 temporaries this
        # stays under the 48 MiB scoped limit on all of v5e/v6e/v7x.
        tile_rows = max(8, (x_block_bytes // (C * 128 * itemsize)) // 8 * 8)
        if tile_rows >= rows:
            tile_rows = rows                     # single full-extent block
        num_p = pl.cdiv(rows, tile_rows)
        mask_tail = (rows % tile_rows) != 0

        kernel = functools.partial(
            _focal_dense_kernel, gamma=gamma, ignore_index=ignore_index,
            rows_total=rows, tile_rows=tile_rows, mask_tail=mask_tail)

        loss_sum, count = pl.pallas_call(
            kernel,
            out_shape=(jax.ShapeDtypeStruct((N, num_p, 1, 1), jnp.float32),
                       jax.ShapeDtypeStruct((N, num_p, 1, 1), jnp.float32)),
            grid_spec=pltpu.PrefetchScalarGridSpec(
                num_scalar_prefetch=0,
                grid=(N, num_p),
                in_specs=[
                    pl.BlockSpec((1, C, tile_rows, 128),
                                 lambda n, p: (n, 0, p, 0)),
                    pl.BlockSpec((1, tile_rows, 128),
                                 lambda n, p: (n, p, 0)),
                ],
                out_specs=out_block,
            ),
            compiler_params=compiler_params,
        )(x4, t3)
    else:
        # Fallback: lane-tiled layout for hw not a multiple of 128.
        x3 = x_nchw.reshape(N, C, hw)
        t3 = t_i32.reshape(N, 1, hw)
        tile_px = max(128, (x_block_bytes // (C * itemsize)) // 128 * 128)
        if tile_px >= hw:
            tile_px = hw                          # full-extent block, no mask
        num_p = pl.cdiv(hw, tile_px)
        mask_tail = (hw % tile_px) != 0

        kernel = functools.partial(
            _focal_lane_kernel, gamma=gamma, ignore_index=ignore_index,
            hw=hw, tile_px=tile_px, mask_tail=mask_tail)

        loss_sum, count = pl.pallas_call(
            kernel,
            out_shape=(jax.ShapeDtypeStruct((N, num_p, 1, 1), jnp.float32),
                       jax.ShapeDtypeStruct((N, num_p, 1, 1), jnp.float32)),
            grid_spec=pltpu.PrefetchScalarGridSpec(
                num_scalar_prefetch=0,
                grid=(N, num_p),
                in_specs=[
                    pl.BlockSpec((1, C, tile_px), lambda n, p: (n, 0, p)),
                    pl.BlockSpec((1, 1, tile_px), lambda n, p: (n, 0, p)),
                ],
                out_specs=out_block,
            ),
            compiler_params=compiler_params,
        )(x3, t3)

    # Tiny final reduction over per-(image, tile) partials (mean over valid
    # pixels, matching nll_loss 'mean' with weight=None; 0/0 -> NaN when every
    # target is ignore_index, same as PyTorch).
    return jnp.sum(loss_sum) / jnp.sum(count)


def _focal_loss_ref(x_nchw, target_nhw, gamma=2, ignore_index=-100):
    # Pure-JAX reference of the PyTorch forward.
    logp = jax.nn.log_softmax(x_nchw.astype(jnp.float32), axis=1)   # (N,C,H,W)
    pt = jnp.exp(logp)
    focal = ((1.0 - pt) ** gamma) * logp
    N, C, H, W = x_nchw.shape
    f2 = jnp.transpose(focal, (0, 2, 3, 1)).reshape(-1, C)
    t = target_nhw.reshape(-1).astype(jnp.int32)
    valid = t != ignore_index
    picked = jnp.take_along_axis(
        f2, jnp.clip(t, 0, C - 1)[:, None], axis=1)[:, 0]
    return (jnp.sum(jnp.where(valid, -picked, 0.0))
            / jnp.sum(valid.astype(jnp.float32)))


if __name__ == "__main__":
    key = jax.random.PRNGKey(0)

    # Dense path: hw = 256 is a multiple of 128.
    kx, kt, km, key = jax.random.split(key, 4)
    N, C, H, W = 2, 4, 16, 16
    x = jax.random.normal(kx, (N, C, H, W), dtype=jnp.float32)
    target = jax.random.randint(kt, (N, H, W), 0, C, dtype=jnp.int32)
    target = jnp.where(jax.random.bernoulli(km, 0.1, (N, H, W)), -100, target)

    loss = focal_loss(x, target, gamma=2, ignore_index=-100)
    jax.block_until_ready(loss)
    ref = _focal_loss_ref(x, target, gamma=2, ignore_index=-100)
    assert jnp.allclose(loss, ref, rtol=1e-5, atol=1e-5), (loss, ref)

    # Fallback lane path: hw = 81 is not a multiple of 128.
    kx2, kt2, km2, key = jax.random.split(key, 4)
    H2 = W2 = 9
    x2 = jax.random.normal(kx2, (N, C, H2, W2), dtype=jnp.float32)
    target2 = jax.random.randint(kt2, (N, H2, W2), 0, C, dtype=jnp.int32)
    target2 = jnp.where(jax.random.bernoulli(km2, 0.1, (N, H2, W2)), -100, target2)

    loss2 = focal_loss(x2, target2, gamma=2, ignore_index=-100)
    jax.block_until_ready(loss2)
    ref2 = _focal_loss_ref(x2, target2, gamma=2, ignore_index=-100)
    assert jnp.allclose(loss2, ref2, rtol=1e-5, atol=1e-5), (loss2, ref2)

    print("KERNEL_OK")
</pallas_src>

<mosaic_0001>
module attributes {stable_mosaic.version = 11 : i64} {
  func.func @_focal_dense_kernel(%arg0: i32, %arg1: i32, %arg2: memref<1x4x2x128xf32, #tpu.memory_space<vmem>>, %arg3: memref<1x2x128xi32, #tpu.memory_space<vmem>>, %arg4: memref<1x1x1x1xf32, #tpu.memory_space<vmem>>, %arg5: memref<1x1x1x1xf32, #tpu.memory_space<vmem>>) attributes {dimension_semantics = [#tpu.dimension_semantics<parallel>, #tpu.dimension_semantics<parallel>], iteration_bounds = array<i64: 2, 1>, scalar_prefetch = 0 : i64, scratch_operands = 0 : i64, tpu.core_type = #tpu.core_type<tc>, window_params = [{transform_indices = @transform_0, window_bounds = array<i64: 1, 4, 2, 128>}, {transform_indices = @transform_1, window_bounds = array<i64: 1, 2, 128>}, {transform_indices = @transform_2, window_bounds = array<i64: 1, 1, 1, 1>}, {transform_indices = @transform_3, window_bounds = array<i64: 1, 1, 1, 1>}]} {
    %c0 = arith.constant 0 : index
    %c0_0 = arith.constant 0 : index
    %c0_1 = arith.constant 0 : index
    %c0_2 = arith.constant 0 : index
    %0 = vector.load %arg2[%c0, %c0_0, %c0_1, %c0_2] : memref<1x4x2x128xf32, #tpu.memory_space<vmem>>, vector<1x4x2x128xf32>
    %1 = vector.shape_cast %0 : vector<1x4x2x128xf32> to vector<4x2x128xf32>
    %c0_3 = arith.constant 0 : index
    %c0_4 = arith.constant 0 : index
    %c0_5 = arith.constant 0 : index
    %2 = vector.load %arg3[%c0_3, %c0_4, %c0_5] : memref<1x2x128xi32, #tpu.memory_space<vmem>>, vector<1x2x128xi32>
    %3 = vector.shape_cast %2 : vector<1x2x128xi32> to vector<2x128xi32>
    %cst = arith.constant dense<0xFF800000> : vector<2x128xf32>
    %4 = vector.multi_reduction <maximumf>, %1, %cst [0] : vector<4x2x128xf32> to vector<2x128xf32>
    %5 = vector.shape_cast %4 : vector<2x128xf32> to vector<1x2x128xf32>
    %6 = vector.broadcast %5 : vector<1x2x128xf32> to vector<4x2x128xf32>
    %7 = arith.subf %1, %6 : vector<4x2x128xf32>
    %8 = math.exp %7 : vector<4x2x128xf32>
    %cst_6 = arith.constant dense<0.000000e+00> : vector<2x128xf32>
    %9 = vector.multi_reduction <add>, %8, %cst_6 [0] : vector<4x2x128xf32> to vector<2x128xf32>
    %10 = vector.shape_cast %9 : vector<2x128xf32> to vector<1x2x128xf32>
    %11 = math.log %10 : vector<1x2x128xf32>
    %cst_7 = arith.constant 0.000000e+00 : f32
    %12 = vector.broadcast %cst_7 : f32 to vector<1x2x128xf32>
    %c0_i32 = arith.constant 0 : i32
    %13 = vector.broadcast %c0_i32 : i32 to vector<2x128xi32>
    %14 = arith.cmpi eq, %3, %13 : vector<2x128xi32>
    %15 = vector.extract_strided_slice %7 {offsets = [0, 0, 0], sizes = [1, 2, 128], strides = [1, 1, 1]} : vector<4x2x128xf32> to vector<1x2x128xf32>
    %16 = vector.shape_cast %14 : vector<2x128xi1> to vector<1x2x128xi1>
    %17 = arith.select %16, %15, %12 : vector<1x2x128xi1>, vector<1x2x128xf32>
    %c1_i32 = arith.constant 1 : i32
    %18 = vector.broadcast %c1_i32 : i32 to vector<2x128xi32>
    %19 = arith.cmpi eq, %3, %18 : vector<2x128xi32>
    %20 = vector.extract_strided_slice %7 {offsets = [1, 0, 0], sizes = [1, 2, 128], strides = [1, 1, 1]} : vector<4x2x128xf32> to vector<1x2x128xf32>
    %21 = vector.shape_cast %19 : vector<2x128xi1> to vector<1x2x128xi1>
    %22 = arith.select %21, %20, %17 : vector<1x2x128xi1>, vector<1x2x128xf32>
    %c2_i32 = arith.constant 2 : i32
    %23 = vector.broadcast %c2_i32 : i32 to vector<2x128xi32>
    %24 = arith.cmpi eq, %3, %23 : vector<2x128xi32>
    %25 = vector.extract_strided_slice %7 {offsets = [2, 0, 0], sizes = [1, 2, 128], strides = [1, 1, 1]} : vector<4x2x128xf32> to vector<1x2x128xf32>
    %26 = vector.shape_cast %24 : vector<2x128xi1> to vector<1x2x128xi1>
    %27 = arith.select %26, %25, %22 : vector<1x2x128xi1>, vector<1x2x128xf32>
    %c3_i32 = arith.constant 3 : i32
    %28 = vector.broadcast %c3_i32 : i32 to vector<2x128xi32>
    %29 = arith.cmpi eq, %3, %28 : vector<2x128xi32>
    %30 = vector.extract_strided_slice %7 {offsets = [3, 0, 0], sizes = [1, 2, 128], strides = [1, 1, 1]} : vector<4x2x128xf32> to vector<1x2x128xf32>
    %31 = vector.shape_cast %29 : vector<2x128xi1> to vector<1x2x128xi1>
    %32 = arith.select %31, %30, %27 : vector<1x2x128xi1>, vector<1x2x128xf32>
    %33 = arith.subf %32, %11 : vector<1x2x128xf32>
    %34 = math.exp %33 : vector<1x2x128xf32>
    %cst_8 = arith.constant 1.000000e+00 : f32
    %35 = vector.broadcast %cst_8 : f32 to vector<1x2x128xf32>
    %36 = arith.subf %35, %34 : vector<1x2x128xf32>
    %37 = arith.mulf %36, %36 : vector<1x2x128xf32>
    %38 = arith.mulf %37, %33 : vector<1x2x128xf32>
    %c-100_i32 = arith.constant -100 : i32
    %39 = vector.broadcast %c-100_i32 : i32 to vector<2x128xi32>
    %40 = arith.cmpi ne, %3, %39 : vector<2x128xi32>
    %cst_9 = arith.constant 0.000000e+00 : f32
    %41 = vector.broadcast %cst_9 : f32 to vector<1x2x128xf32>
    %42 = arith.subf %41, %38 : vector<1x2x128xf32>
    %cst_10 = arith.constant 0.000000e+00 : f32
    %43 = vector.shape_cast %40 : vector<2x128xi1> to vector<1x2x128xi1>
    %44 = vector.broadcast %cst_10 : f32 to vector<1x2x128xf32>
    %45 = arith.select %43, %42, %44 : vector<1x2x128xi1>, vector<1x2x128xf32>
    %cst_11 = arith.constant 0.000000e+00 : f32
    %46 = vector.broadcast %cst_11 : f32 to vector<1x1x1x1xf32>
    %47 = vector.shape_cast %45 : vector<1x2x128xf32> to vector<1x1x2x128xf32>
    %cst_12 = arith.constant dense<0.000000e+00> : vector<1xf32>
    %48 = vector.multi_reduction <add>, %47, %cst_12 [1, 2, 3] : vector<1x1x2x128xf32> to vector<1xf32>
    %49 = vector.shape_cast %48 : vector<1xf32> to vector<1x1x1x1xf32>
    %50 = vector.extract %49[0, 0, 0, 0] : f32 from vector<1x1x1x1xf32>
    %51 = vector.broadcast %50 : f32 to vector<1x1x1x1xf32>
    %52 = arith.addf %46, %51 : vector<1x1x1x1xf32>
    %c0_13 = arith.constant 0 : index
    %c0_14 = arith.constant 0 : index
    %c0_15 = arith.constant 0 : index
    %c0_16 = arith.constant 0 : index
    %53 = vector.load %arg4[%c0_13, %c0_14, %c0_15, %c0_16] : memref<1x1x1x1xf32, #tpu.memory_space<vmem>>, vector<1x1x1x1xf32>
    tpu.vector_store %arg4[%c0_13, %c0_14, %c0_15, %c0_16], %52 {strides = array<i32>} : memref<1x1x1x1xf32, #tpu.memory_space<vmem>>, vector<1x1x1x1xf32>,
    %cst_17 = arith.constant 0.000000e+00 : f32
    %54 = vector.broadcast %cst_17 : f32 to vector<1x1x1x1xf32>
    %55 = arith.extui %40 : vector<2x128xi1> to vector<2x128xi32>
    %56 = arith.sitofp %55 : vector<2x128xi32> to vector<2x128xf32>
    %57 = vector.shape_cast %56 : vector<2x128xf32> to vector<1x2x128xf32>
    %cst_18 = arith.constant dense<0.000000e+00> : vector<1xf32>
    %58 = vector.multi_reduction <add>, %57, %cst_18 [1, 2] : vector<1x2x128xf32> to vector<1xf32>
    %59 = vector.shape_cast %58 : vector<1xf32> to vector<1x1x1xf32>
    %60 = vector.extract %59[0, 0, 0] : f32 from vector<1x1x1xf32>
    %61 = vector.broadcast %60 : f32 to vector<1x1x1x1xf32>
    %62 = arith.addf %54, %61 : vector<1x1x1x1xf32>
    %c0_19 = arith.constant 0 : index
    %c0_20 = arith.constant 0 : index
    %c0_21 = arith.constant 0 : index
    %c0_22 = arith.constant 0 : index
    %63 = vector.load %arg5[%c0_19, %c0_20, %c0_21, %c0_22] : memref<1x1x1x1xf32, #tpu.memory_space<vmem>>, vector<1x1x1x1xf32>
    tpu.vector_store %arg5[%c0_19, %c0_20, %c0_21, %c0_22], %62 {strides = array<i32>} : memref<1x1x1x1xf32, #tpu.memory_space<vmem>>, vector<1x1x1x1xf32>,
    return
  }
  func.func @transform_0(%arg0: i32, %arg1: i32) -> (i32, i32, i32, i32) {
    %c0_i32 = arith.constant 0 : i32
    %c0_i32_0 = arith.constant 0 : i32
    %c0_i32_1 = arith.constant 0 : i32
    return %arg0, %c0_i32, %arg1, %c0_i32_0 : i32, i32, i32, i32
  }
  func.func @transform_1(%arg0: i32, %arg1: i32) -> (i32, i32, i32) {
    %c0_i32 = arith.constant 0 : i32
    %c0_i32_0 = arith.constant 0 : i32
    return %arg0, %arg1, %c0_i32 : i32, i32, i32
  }
  func.func @transform_2(%arg0: i32, %arg1: i32) -> (i32, i32, i32, i32) {
    %c0_i32 = arith.constant 0 : i32
    %c0_i32_0 = arith.constant 0 : i32
    %c0_i32_1 = arith.constant 0 : i32
    return %arg0, %arg1, %c0_i32, %c0_i32_0 : i32, i32, i32, i32
  }
  func.func @transform_3(%arg0: i32, %arg1: i32) -> (i32, i32, i32, i32) {
    %c0_i32 = arith.constant 0 : i32
    %c0_i32_0 = arith.constant 0 : i32
    %c0_i32_1 = arith.constant 0 : i32
    return %arg0, %arg1, %c0_i32, %c0_i32_0 : i32, i32, i32, i32
  }
}

</mosaic_0001>

<llo_original>
// kernel: tpu_custom_call.1
$region0: #{tpu_custom_call.1}
  #allocation0 [shape = 'u32[]', space=smem, size = 0x4, offset = 0x4, fixed_abs, tag = 'smem constant byte address 0x4 - core index']
  #allocation1 [shape = 'u32[144,128]{1,0:T(1,128)}', space=vmem, size = 0x12000, scoped, tag = 'internal scratch']
  %s0 = inlined_call_operand.hbm [shape: f32[2,4,2,128], index: 0, kind: input, shape index: {}]
  %s1 = inlined_call_operand.hbm [shape: s32[2,2,128], index: 1, kind: input, shape index: {}]
  %s2 = inlined_call_operand.vmem [shape: f32[2,1,1,1], index: 2, kind: output, shape index: {0}]
  %s3 = inlined_call_operand.vmem [shape: f32[2,1,1,1], index: 3, kind: output, shape index: {1}]
  %4 = xla_tuple %s2, %s3
  %s5 = sld [smem:[#allocation0]]
  $region57: #{tpu_custom_call.1} parent=0
    _
  %s7 = ssub.s32 1, %s5
  %s8 = scalar_select 0, %s7, %s5
  $region1: #{tpu_custom_call.1} parent=0
    #allocation2 [shape = 'u8[8192]{0}', space=vmem, size = 0x2000, scoped, tag = 'input window, operand 0']
    #allocation3 [shape = 's32[2]{0}', space=sflag, size = 0x8, scoped, tag = 'scoped memory for tpu_custom_call.1']
    #allocation4 [shape = 'u8[2048]{0}', space=vmem, size = 0x800, scoped, tag = 'input window, operand 1']
    #allocation5 [shape = 's32[2]{0}', space=sflag, size = 0x8, scoped, tag = 'scoped memory for tpu_custom_call.1']
    %9 = vsyncpa [#allocation3], 0
    %s10 = scalar_lea.sflag [#allocation3], 1
    %11 = vsyncpa %s10, 0
    %12 = vsyncpa [#allocation5], 0
    %s13 = scalar_lea.sflag [#allocation5], 1
    %14 = vsyncpa %s13, 0
    loop: start=0, step=1, limit=4
    $region2: #{tpu_custom_call.1} parent=1 // loop_pre_header
      _
    $region3: #{tpu_custom_call.1} parent=1 // loop_header
      %s16 = sphi 0, %s20
      %p17 = scmp.ge.s32.totalorder %s16, 4
      %s23 = sphi 0, %s35
      %s24 = sphi 0, %s31
      %s25 = sphi 0, %s23
      %s26 = sphi 0, %s24
      %s27 = sphi 0, %s25
      %s28 = sphi 0, %s26
      %s40 = sphi 0, %s42
      %s43 = sphi 0, %s40
      %s44 = sphi 0, %s43
      %s60 = sphi 0, %s44
      %s68 = sphi 0, %s70
      %s71 = sphi 0, %s68
      %s72 = sphi 0, %s71
      %s88 = sphi 0, %s72
      %s96 = sphi 0, %s98
      %s99 = sphi 0, %s96
      %s100 = sphi 0, %s99
      %s116 = sphi 0, %s100
      %s124 = sphi 0, %s126
      %s127 = sphi 0, %s124
      %s128 = sphi 0, %s127
      %s144 = sphi 0, %s128
    $region4: #{tpu_custom_call.1} parent=1 // loop_header_branch
      %19 = sbr.rel (%p17) target = $region8
    $region5: #{tpu_custom_call.1} parent=1 // loop_body
      %s21 = ssub.s32 %s16, 1
      %s22 = ssub.s32 %s16, 2
      %s29 = sadd.s32 1, %s24
      %p30 = scmp.ge.s32.totalorder %s29, 1
      %s31 = scalar_select %p30, 0, %s29
      %s32 = sadd.s32 1, %s23
      %s33 = scalar_select %p30, %s32, %s23
      %p34 = scmp.ge.s32.totalorder %s33, 2
      %s35 = scalar_select %p34, 0, %s33
      %s36 = ssub.s32 %s23, %s35
      %s37 = ssub.s32 %s24, %s31
      %s38 = sor.u32 %s36, %s37
      %p39 = scmp.eq.s32.totalorder %s38, 0
      %s41 = sadd.s32 %s40, 1
      %s42 = scalar_select %p39, %s40, %s41
      %p45 = pneg %p39
      %p46 = scmp.eq.s32.totalorder %s16, 1
      %p47 = por %p45, %p46
      %p48 = scmp.ne.s32.totalorder %s40, %s43
      %p49 = scmp.eq.s32.totalorder %s16, 0
      %p50 = por %p48, %p49
      %p51 = scmp.ne.s32.totalorder %s40, %s43
      %p52 = scmp.eq.s32.totalorder %s21, 1
      %p53 = por %p51, %p52
      %p54 = scmp.ne.s32.totalorder %s43, %s44
      %p55 = scmp.eq.s32.totalorder %s21, 0
      %p56 = por %p54, %p55
      %p57 = scmp.ne.s32.totalorder %s43, %s44
      %p58 = scmp.eq.s32.totalorder %s22, 1
      %p59 = por %p57, %p58
      %p61 = scmp.ne.s32.totalorder %s44, %s60
      %p62 = scmp.eq.s32.totalorder %s22, 0
      %p63 = por %p61, %p62
      %s64 = ssub.s32 %s23, %s35
      %s65 = ssub.s32 %s24, %s31
      %s66 = sor.u32 %s64, %s65
      %p67 = scmp.eq.s32.totalorder %s66, 0
      %s69 = sadd.s32 %s68, 1
      %s70 = scalar_select %p67, %s68, %s69
      %p73 = pneg %p67
      %p74 = scmp.eq.s32.totalorder %s16, 1
      %p75 = por %p73, %p74
      %p76 = scmp.ne.s32.totalorder %s68, %s71
      %p77 = scmp.eq.s32.totalorder %s16, 0
      %p78 = por %p76, %p77
      %p79 = scmp.ne.s32.totalorder %s68, %s71
      %p80 = scmp.eq.s32.totalorder %s21, 1
      %p81 = por %p79, %p80
      %p82 = scmp.ne.s32.totalorder %s71, %s72
      %p83 = scmp.eq.s32.totalorder %s21, 0
      %p84 = por %p82, %p83
      %p85 = scmp.ne.s32.totalorder %s71, %s72
      %p86 = scmp.eq.s32.totalorder %s22, 1
      %p87 = por %p85, %p86
      %p89 = scmp.ne.s32.totalorder %s72, %s88
      %p90 = scmp.eq.s32.totalorder %s22, 0
      %p91 = por %p89, %p90
      %s92 = ssub.s32 %s23, %s35
      %s93 = ssub.s32 %s24, %s31
      %s94 = sor.u32 %s92, %s93
      %p95 = scmp.eq.s32.totalorder %s94, 0
      %s97 = sadd.s32 %s96, 1
      %s98 = scalar_select %p95, %s96, %s97
      %p101 = pneg %p95
      %p102 = scmp.eq.s32.totalorder %s16, 1
      %p103 = por %p101, %p102
      %p104 = scmp.ne.s32.totalorder %s96, %s99
      %p105 = scmp.eq.s32.totalorder %s16, 0
      %p106 = por %p104, %p105
      %p107 = scmp.ne.s32.totalorder %s96, %s99
      %p108 = scmp.eq.s32.totalorder %s21, 1
      %p109 = por %p107, %p108
      %p110 = scmp.ne.s32.totalorder %s99, %s100
      %p111 = scmp.eq.s32.totalorder %s21, 0
      %p112 = por %p110, %p111
      %p113 = scmp.ne.s32.totalorder %s99, %s100
      %p114 = scmp.eq.s32.totalorder %s22, 1
      %p115 = por %p113, %p114
      %p117 = scmp.ne.s32.totalorder %s100, %s116
      %p118 = scmp.eq.s32.totalorder %s22, 0
      %p119 = por %p117, %p118
      %s120 = ssub.s32 %s23, %s35
      %s121 = ssub.s32 %s24, %s31
      %s122 = sor.u32 %s120, %s121
      %p123 = scmp.eq.s32.totalorder %s122, 0
      %s125 = sadd.s32 %s124, 1
      %s126 = scalar_select %p123, %s124, %s125
      %p129 = pneg %p123
      %p130 = scmp.eq.s32.totalorder %s16, 1
      %p131 = por %p129, %p130
      %p132 = scmp.ne.s32.totalorder %s124, %s127
      %p133 = scmp.eq.s32.totalorder %s16, 0
      %p134 = por %p132, %p133
      %p135 = scmp.ne.s32.totalorder %s124, %s127
      %p136 = scmp.eq.s32.totalorder %s21, 1
      %p137 = por %p135, %p136
      %p138 = scmp.ne.s32.totalorder %s127, %s128
      %p139 = scmp.eq.s32.totalorder %s21, 0
      %p140 = por %p138, %p139
      %p141 = scmp.ne.s32.totalorder %s127, %s128
      %p142 = scmp.eq.s32.totalorder %s22, 1
      %p143 = por %p141, %p142
      %p145 = scmp.ne.s32.totalorder %s128, %s144
      %p146 = scmp.eq.s32.totalorder %s22, 0
      %p147 = por %p145, %p146
      %p148 = scmp.le.s32.totalorder 1, %s16
      %p149 = scmp.lt.s32.totalorder %s16, 3
      %p150 = pnand %p148, %p149
      %p151 = pneg %p150
      // Predicated region
      $region9: #{tpu_custom_call.1} parent=5 // pred_check
        _
      $region10: #{tpu_custom_call.1} parent=5 // pred_check_branch
        %153 = sbr.rel (%p150) target = $region12
      $region11: #{tpu_custom_call.1} parent=5 // pred_region
        %s154 = ssub.s32 %s16, 1
      $region12: #{tpu_custom_call.1} parent=5 // pred_fallthru
        _
      %p155 = scmp.lt.s32.totalorder %s16, 2
      // Predicated region
      $region13: #{tpu_custom_call.1} parent=5 // pred_check
        %p156 = pneg %p155
      $region14: #{tpu_custom_call.1} parent=5 // pred_check_branch
        %158 = sbr.rel (%p156) target = $region16
      $region15: #{tpu_custom_call.1} parent=5 // pred_region
        // Predicated region
        $region17: #{tpu_custom_call.1} parent=15 // pred_check
          %p159 = pneg %p50
        $region18: #{tpu_custom_call.1} parent=15 // pred_check_branch
          %161 = sbr.rel (%p159) target = $region20
        $region19: #{tpu_custom_call.1} parent=15 // pred_region
          %s162 = sand.u32 %s40, 1
          %s163 = scalar_lea.sflag [#allocation3], %s162
          %s164 = sand.u32 %s40, 1
          %s165 = smul.addr %s164, 8
          %s166 = scalar_lea.vmem [#allocation2], %s165
          %s168 = ssub.s32 128, 128
          %169 = vsyncadd %s163, %s168
          %s170 = smul.addr %s23, 4
          %s171 = sadd.s32 %s24, %s170
          %s172 = smul.addr %s171, 32
          %s173 = scalar_lea.hbm %s0, %s172
          %s174 = sshll.u32 %s166, 4
          %s175 = int_to_ptr.vmem [resolvable:$true] %s174
          %180 = dma.hbm_to_vmem [thread:$0]  %s173, 128, %s175, %s163, 32, 32, 2
        $region20: #{tpu_custom_call.1} parent=15 // pred_fallthru
          _
        // Predicated region
        $region21: #{tpu_custom_call.1} parent=15 // pred_check
          %p181 = pneg %p78
        $region22: #{tpu_custom_call.1} parent=15 // pred_check_branch
          %183 = sbr.rel (%p181) target = $region24
        $region23: #{tpu_custom_call.1} parent=15 // pred_region
          %s184 = sand.u32 %s68, 1
          %s185 = scalar_lea.sflag [#allocation5], %s184
          %s186 = sand.u32 %s68, 1
          %s187 = smul.addr %s186, 2
          %s188 = scalar_lea.vmem [#allocation4], %s187
          %s190 = ssub.s32 32, 32
          %191 = vsyncadd %s185, %s190
          %s192 = sadd.s32 %s24, %s23
          %s193 = smul.addr %s192, 32
          %s194 = scalar_lea.hbm %s1, %s193
          %s196 = sshll.u32 %s188, 4
          %s197 = int_to_ptr.vmem [resolvable:$true] %s196
          %199 = dma.hbm_to_vmem [thread:$0]  %s194, 32, %s197, %s185
        $region24: #{tpu_custom_call.1} parent=15 // pred_fallthru
          _
      $region16: #{tpu_custom_call.1} parent=5 // pred_fallthru
        _
      %p200 = scmp.le.s32.totalorder 1, %s16
      %p201 = scmp.lt.s32.totalorder %s16, 3
      %p202 = pnand %p200, %p201
      %p203 = pneg %p202
      // Predicated region
      $region25: #{tpu_custom_call.1} parent=5 // pred_check
        _
      $region26: #{tpu_custom_call.1} parent=5 // pred_check_branch
        %205 = sbr.rel (%p202) target = $region28
      $region27: #{tpu_custom_call.1} parent=5 // pred_region
        %s206 = ssub.s32 %s16, 1
        %s207 = sand.u32 %s43, 1
        %s208 = scalar_lea.sflag [#allocation3], %s207
        %s209 = sand.u32 %s43, 1
        %s210 = smul.addr %s209, 8
        %s211 = scalar_lea.vmem [#allocation2], %s210
        // Predicated region
        $region29: #{tpu_custom_call.1} parent=27 // pred_check
          %p212 = pneg %p56
        $region30: #{tpu_custom_call.1} parent=27 // pred_check_branch
          %214 = sbr.rel (%p212) target = $region32
        $region31: #{tpu_custom_call.1} parent=27 // pred_region
          %215 = dma.done %s208, 128
        $region32: #{tpu_custom_call.1} parent=27 // pred_fallthru
          _
        %s216 = sand.u32 %s71, 1
        %s217 = scalar_lea.sflag [#allocation5], %s216
        %s218 = sand.u32 %s71, 1
        %s219 = smul.addr %s218, 2
        %s220 = scalar_lea.vmem [#allocation4], %s219
        // Predicated region
        $region33: #{tpu_custom_call.1} parent=27 // pred_check
          %p221 = pneg %p84
        $region34: #{tpu_custom_call.1} parent=27 // pred_check_branch
          %223 = sbr.rel (%p221) target = $region36
        $region35: #{tpu_custom_call.1} parent=27 // pred_region
          %224 = dma.done %s217, 32
        $region36: #{tpu_custom_call.1} parent=27 // pred_fallthru
          _
        %s225 = sand.u32 %s43, 1
        %s226 = scalar_lea.sflag [#allocation3], %s225
        %s227 = sand.u32 %s43, 1
        %s228 = smul.addr %s227, 8
        %s229 = scalar_lea.vmem [#allocation2], %s228
        %p230 = pneg %p56
        %p231 = pneg %p53
        %s232 = sand.u32 %s71, 1
        %s233 = scalar_lea.sflag [#allocation5], %s232
        %s234 = sand.u32 %s71, 1
        %s235 = smul.addr %s234, 2
        %s236 = scalar_lea.vmem [#allocation4], %s235
        %p237 = pneg %p84
        %p238 = pneg %p81
        %p239 = pneg %p112
        %p240 = pneg %p109
        %p241 = scmp.lt.s32.totalorder %s25, 1
        %s242 = scalar_select %p241, %s25, 1
        %p243 = scmp.lt.s32.totalorder %s26, 0
        %s244 = scalar_select %p243, %s26, 0
        %s245 = sadd.s32 %s244, %s242
        %s246 = scalar_lea.vmem %s2, %s245
        %p247 = pneg %p140
        %p248 = pneg %p137
        %p249 = scmp.lt.s32.totalorder %s25, 1
        %s250 = scalar_select %p249, %s25, 1
        %p251 = scmp.lt.s32.totalorder %s26, 0
        %s252 = scalar_select %p251, %s26, 0
        %s253 = sadd.s32 %s252, %s250
        %s254 = scalar_lea.vmem %s3, %s253
        %p255 = scmp.lt.s32.totalorder %s25, 1
        %s256 = scalar_select %p255, %s25, 1
        %p257 = scmp.lt.s32.totalorder %s26, 0
        %s258 = scalar_select %p257, %s26, 0
        %s259 = sadd.s32 %s258, %s256
        %s260 = scalar_lea.vmem %s2, %s259
        %p261 = scmp.lt.s32.totalorder %s25, 1
        %s262 = scalar_select %p261, %s25, 1
        %p263 = scmp.lt.s32.totalorder %s26, 0
        %s264 = scalar_select %p263, %s26, 0
        %s265 = sadd.s32 %s264, %s262
        %s266 = scalar_lea.vmem %s3, %s265
        %v267 = vld [vmem:[%s211] sm:$0x3]
        %v268 = vld [vmem:[%s211 + $0x2] sm:$0x3]
        %v269 = vld [vmem:[%s211 + $0x4] sm:$0x3]
        %v270 = vld [vmem:[%s211 + $0x6] sm:$0x3]
        %v271 = vld [vmem:[%s220] sm:$0x3]
        %vm272 = vcmask 1041408
        %v273 = vsel %vm272, %v267, -inf
        %v274 = vsel %vm272, %v268, -inf
        %v275 = vsel %vm272, %v269, -inf
        %v276 = vsel %vm272, %v270, -inf
        %v277 = vmax.f32 %v273, %v274
        %v278 = vmax.f32 %v275, %v276
        %v279 = vmax.f32 %v277, %v278
        %v280 = vsub.f32 %v267, %v279
        %v281 = vsub.f32 %v268, %v279
        %v282 = vsub.f32 %v269, %v279
        %v283 = vsub.f32 %v270, %v279
        %v284 = vmul.f32 %v280, 1.442695
        %v285 = vpow.pop %v284
        %v286 = vmul.f32 %v281, 1.442695
        %v287 = vpow.pop %v286
        %v288 = vmul.f32 %v282, 1.442695
        %v289 = vpow.pop %v288
        %v290 = vmul.f32 %v283, 1.442695
        %v291 = vpow.pop %v290
        %v292 = vsel %vm272, %v285, 0.0
        %v293 = vsel %vm272, %v287, 0.0
        %v294 = vadd.f32 %v292, %v293
        %v295 = vsel %vm272, %v289, 0.0
        %v296 = vadd.f32 %v294, %v295
        %v297 = vsel %vm272, %v291, 0.0
        %v298 = vadd.f32 %v296, %v297
        %v299 = vlog2.pop %v298
        %v300 = vmul.f32 %v299, 0.6931472
        %vm301 = vcmp.eq.s32.totalorder %v271, 0
        %v302 = vsel %vm301, %v280, 0.0
        %vm303 = vcmp.eq.s32.totalorder %v271, 1
        %v304 = vsel %vm303, %v281, %v302
        %vm305 = vcmp.eq.s32.totalorder %v271, 2
        %v306 = vsel %vm305, %v282, %v304
        %vm307 = vcmp.eq.s32.totalorder %v271, 3
        %v308 = vsel %vm307, %v283, %v306
        %v309 = vsub.f32 %v308, %v300
        %v310 = vmul.f32 %v309, 1.442695
        %v311 = vpow.pop %v310
        %v312 = vsub.f32 1.0, %v311
        %v313 = vmul.f32 %v312, %v312
        %v314 = vmul.f32 %v313, %v309
        %vm315 = vcmp.ne.s32.totalorder %v271, 4294967196
        %v316 = vsub.f32 0.0, %v314
        %v317 = vsel %vm315, %v316, 0.0
        %v318 = vsel %vm272, %v317, 0.0
        %319 = vadd.xlane.f32.xlu0 %v318
        %v320 = vpop.xlane.xlu0 %319
        %v321 = vrot.slane %v320, 4
        %v322 = vadd.f32 %v320, %v321
        %v323 = vrot.slane %v322, 2
        %v324 = vadd.f32 %v322, %v323
        %v325 = vrot.slane %v324, 1
        %v326 = vadd.f32 %v324, %v325
        %s327 = vtos %v326
        %v328 = vstv %s327
        %v329 = vadd.f32 %v328, 0.0
        %vm330 = vcmask 0
        %331 = vst.msk [vmem:[%s260] sm:$0x1] %vm330, %v329
        %v332 = vsel %vm315, 1, 0
        %v333 = vcvt.s32.f32 %v332
        %v334 = vsel %vm272, %v333, 0.0
        %335 = vadd.xlane.f32.xlu0 %v334
        %v336 = vpop.xlane.xlu0 %335
        %v337 = vrot.slane %v336, 4
        %v338 = vadd.f32 %v336, %v337
        %v339 = vrot.slane %v338, 2
        %v340 = vadd.f32 %v338, %v339
        %v341 = vrot.slane %v340, 1
        %v342 = vadd.f32 %v340, %v341
        %s343 = vtos %v342
        %v344 = vstv %s343
        %v345 = vadd.f32 %v344, 0.0
        %346 = vst.msk [vmem:[%s266] sm:$0x1] %vm330, %v345
        %p347 = scmp.lt.s32.totalorder %s25, 1
        %s348 = scalar_select %p347, %s25, 1
        %p349 = scmp.lt.s32.totalorder %s26, 0
        %s350 = scalar_select %p349, %s26, 0
        %s351 = sadd.s32 %s350, %s348
        %s352 = scalar_lea.vmem %s2, %s351
        %p353 = scmp.lt.s32.totalorder %s25, 1
        %s354 = scalar_select %p353, %s25, 1
        %p355 = scmp.lt.s32.totalorder %s26, 0
        %s356 = scalar_select %p355, %s26, 0
        %s357 = sadd.s32 %s356, %s354
        %s358 = scalar_lea.vmem %s3, %s357
        // Predicated region
        $region37: #{tpu_custom_call.1} parent=27 // pred_check
          %p359 = pneg %p109
        $region38: #{tpu_custom_call.1} parent=27 // pred_check_branch
          %361 = sbr.rel (%p359) target = $region40
        $region39: #{tpu_custom_call.1} parent=27 // pred_region
          _
        $region40: #{tpu_custom_call.1} parent=27 // pred_fallthru
          _
        // Predicated region
        $region41: #{tpu_custom_call.1} parent=27 // pred_check
          %p362 = pneg %p137
        $region42: #{tpu_custom_call.1} parent=27 // pred_check_branch
          %364 = sbr.rel (%p362) target = $region44
        $region43: #{tpu_custom_call.1} parent=27 // pred_region
          _
        $region44: #{tpu_custom_call.1} parent=27 // pred_fallthru
          _
      $region28: #{tpu_custom_call.1} parent=5 // pred_fallthru
        _
      %p365 = scmp.le.s32.totalorder 2, %s16
      // Predicated region
      $region45: #{tpu_custom_call.1} parent=5 // pred_check
        %p366 = pneg %p365
      $region46: #{tpu_custom_call.1} parent=5 // pred_check_branch
        %368 = sbr.rel (%p366) target = $region48
      $region47: #{tpu_custom_call.1} parent=5 // pred_region
        %s369 = ssub.s32 %s16, 2
        // Predicated region
        $region49: #{tpu_custom_call.1} parent=47 // pred_check
          %p370 = pneg %p115
        $region50: #{tpu_custom_call.1} parent=47 // pred_check_branch
          %372 = sbr.rel (%p370) target = $region52
        $region51: #{tpu_custom_call.1} parent=47 // pred_region
          %p373 = scmp.lt.s32.totalorder %s27, 1
          %s374 = scalar_select %p373, %s27, 1
          %p375 = scmp.lt.s32.totalorder %s28, 0
          %s376 = scalar_select %p375, %s28, 0
          %s377 = sadd.s32 %s376, %s374
          %s378 = scalar_lea.vmem %s2, %s377
        $region52: #{tpu_custom_call.1} parent=47 // pred_fallthru
          _
        // Predicated region
        $region53: #{tpu_custom_call.1} parent=47 // pred_check
          %p379 = pneg %p143
        $region54: #{tpu_custom_call.1} parent=47 // pred_check_branch
          %381 = sbr.rel (%p379) target = $region56
        $region55: #{tpu_custom_call.1} parent=47 // pred_region
          %p382 = scmp.lt.s32.totalorder %s27, 1
          %s383 = scalar_select %p382, %s27, 1
          %p384 = scmp.lt.s32.totalorder %s28, 0
          %s385 = scalar_select %p384, %s28, 0
          %s386 = sadd.s32 %s385, %s383
          %s387 = scalar_lea.vmem %s3, %s386
        $region56: #{tpu_custom_call.1} parent=47 // pred_fallthru
          _
      $region48: #{tpu_custom_call.1} parent=5 // pred_fallthru
        _
    $region6: #{tpu_custom_call.1} parent=1 // loop_footer
      %s20 = sadd.s32 1, %s16
    $region7: #{tpu_custom_call.1} parent=1 // loop_footer_branch
      %15 = sbr.rel target = $region3
    $region8: #{tpu_custom_call.1} parent=1 // loop_exit
      _
    %388 = vsyncpa [#allocation3], 1
    %s389 = scalar_lea.sflag [#allocation3], 1
    %390 = vsyncpa %s389, 1
    %391 = vsyncpa [#allocation5], 1
    %s392 = scalar_lea.sflag [#allocation5], 1
    %393 = vsyncpa %s392, 1

</llo_original>
